<compile_context>
chip_gen: v7x
topology: tpu7x:2x2x1
jax: 0.10.0
libtpu: 0.0.40
codegen_flags: <defaults>
</compile_context>

<pallas_src>
import functools

import jax
import jax.numpy as jnp
from jax.experimental import pallas as pl
from jax.experimental.pallas import tpu as pltpu


_LANE = 128        # vreg lane width; also the HW-tile rounding granule
_MIN_STEPS = 4     # target grid steps (>= 2 per TensorCore on v7x)


def _round_up(x, m):
    return (x + m - 1) // m * m


def _cdiv(a, b):
    return -(-a // b)


def _sublane_multiple(itemsize):
    # Sub-32-bit dtypes pack along sublanes: f32 -> 8, bf16/f16 -> 16, int8/fp8 -> 32.
    return 8 * max(1, 4 // max(1, itemsize))


def _vmem_budget(max_block_bytes=None):
    """Returns (vmem_limit_bytes, padded-byte budget for all pipelined blocks)."""
    try:
        phys = int(pltpu.get_tpu_info().vmem_capacity_bytes)
    except Exception:
        phys = 64 * 1024 * 1024            # v7x per-TC VMEM; conservative everywhere
    limit = min(phys // 2, 64 * 1024 * 1024)   # 32 MiB on v7x, 64 MiB on v5e/v6e
    budget = limit // 2                        # headroom for compiler scratch
    if max_block_bytes is not None:
        budget = min(budget, int(max_block_bytes))
    return int(limit), int(budget)


def _resident_bytes(b_tile, t_hw, c, itemsize):
    """Padded VMEM bytes of the double-buffered (input + output) block pair."""
    s = _sublane_multiple(itemsize)
    nhwc = b_tile * _round_up(t_hw, s) * _round_up(c, _LANE) * itemsize   # (b, t_hw, C)
    nchw = b_tile * _round_up(c, s) * _round_up(t_hw, _LANE) * itemsize   # (b, C, t_hw)
    return 2 * (nhwc + nchw)   # x2: double buffering of both sides


def _choose_tiles(n, hw, c, itemsize, budget):
    """Pick (b_tile, t_hw) from the PADDED footprint, then ensure enough grid steps."""
    # Padded bytes contributed by one HW row (at b_tile=1), amortized.
    row = max(1, _resident_bytes(1, _LANE, c, itemsize) // _LANE)
    t_max = max(_LANE, (budget // row) // _LANE * _LANE)

    if t_max >= hw:
        # Small images: take full HW and fold batch elements into one block.
        t_hw = hw
        per_image = max(1, _resident_bytes(1, hw, c, itemsize))
        b_tile = int(max(1, min(n, budget // per_image)))
    else:
        # Large images: one batch element per block, HW tiled in 128-row granules.
        t_hw = int(t_max)
        b_tile = 1

    def steps(bt, th):
        return _cdiv(n, bt) * _cdiv(hw, th)

    # Best-effort: >= _MIN_STEPS grid steps (feeds both v7x TCs + gives the
    # pipeline something to double-buffer).  Shrink batch folding first, then HW.
    while b_tile > 1 and steps(b_tile, t_hw) < _MIN_STEPS:
        b_tile = max(1, b_tile // 2)
    while hw > _LANE and t_hw > _LANE and steps(b_tile, t_hw) < _MIN_STEPS:
        smaller = _round_up(_cdiv(t_hw, 2), _LANE)
        if smaller >= t_hw:
            break
        t_hw = smaller

    return int(b_tile), int(t_hw)


def _swap_last2_kernel(x_ref, o_ref):
    # (B_TILE, A, B) block -> (B_TILE, B, A) block (pure XLU relayout, no MXU).
    o_ref[...] = jnp.transpose(x_ref[...], (0, 2, 1))


@functools.partial(jax.jit, static_argnames=("order", "max_block_bytes"))
def channel_swap(x, order, max_block_bytes=None):
    """Pallas implementation of ChannelSwap.forward.

    x: 4-D array. For 'hwc_chw' it is (N, H, W, C); for 'chw_hwc' it is (N, C, H, W).
    """
    if x.ndim != 4:
        raise ValueError("ChannelSwap kernel expects a 4-D input")
    n, d1, d2, d3 = (int(s) for s in x.shape)
    itemsize = jnp.dtype(x.dtype).itemsize
    vmem_limit, budget = _vmem_budget(max_block_bytes)

    if order == "hwc_chw":
        h, w, c = d1, d2, d3
        hw = h * w
        b_tile, t_hw = _choose_tiles(n, hw, c, itemsize, budget)
        x2 = x.reshape(n, hw, c)                      # free contiguous reshape
        in_spec = pl.BlockSpec((b_tile, t_hw, c), lambda b, t: (b, t, 0))
        out_spec = pl.BlockSpec((b_tile, c, t_hw), lambda b, t: (b, 0, t))
        out2_shape = jax.ShapeDtypeStruct((n, c, hw), x.dtype)
        final_shape = (n, c, h, w)
    elif order == "chw_hwc":
        c, h, w = d1, d2, d3
        hw = h * w
        b_tile, t_hw = _choose_tiles(n, hw, c, itemsize, budget)
        x2 = x.reshape(n, c, hw)                      # free contiguous reshape
        in_spec = pl.BlockSpec((b_tile, c, t_hw), lambda b, t: (b, 0, t))
        out_spec = pl.BlockSpec((b_tile, t_hw, c), lambda b, t: (b, t, 0))
        out2_shape = jax.ShapeDtypeStruct((n, hw, c), x.dtype)
        final_shape = (n, h, w, c)
    else:
        raise NotImplementedError(order)

    grid = (pl.cdiv(n, b_tile), pl.cdiv(hw, t_hw))

    y2 = pl.pallas_call(
        _swap_last2_kernel,
        out_shape=out2_shape,
        grid_spec=pltpu.PrefetchScalarGridSpec(
            num_scalar_prefetch=0,
            grid=grid,
            in_specs=[in_spec],
            out_specs=out_spec,
        ),
        compiler_params=pltpu.CompilerParams(
            # Each grid point writes a disjoint output block -> both axes are
            # independent; shards across v7x's 2 TensorCores (neutral on v5e/v6e).
            dimension_semantics=("parallel", "parallel"),
            # Derived per-generation (32 MiB on v7x, 64 MiB on v5e/v6e); the
            # padded double-buffered working set is sized to <= half of this.
            vmem_limit_bytes=vmem_limit,
        ),
        # Pure-bandwidth kernel: read once + write once, zero flops.
        cost_estimate=pl.CostEstimate(
            flops=0, transcendentals=0,
            bytes_accessed=2 * n * hw * c * itemsize),
    )(x2)

    return y2.reshape(final_shape)                    # free contiguous reshape


if __name__ == "__main__":
    key = jax.random.PRNGKey(0)
    k1, k2, k3, k4, k5, k6 = jax.random.split(key, 6)

    # 'hwc_chw': NHWC input (batch=2, H=16, W=16, C=4) -> NCHW output.
    x_hwc = jax.random.normal(k1, (2, 16, 16, 4), dtype=jnp.float32)
    y_chw = jax.block_until_ready(channel_swap(x_hwc, "hwc_chw"))
    assert y_chw.shape == (2, 4, 16, 16)
    assert jnp.array_equal(y_chw, jnp.transpose(x_hwc, (0, 3, 1, 2)))

    # 'chw_hwc': NCHW input (batch=2, C=4, H=16, W=16) -> NHWC output.
    x_chw = jax.random.normal(k2, (2, 4, 16, 16), dtype=jnp.float32)
    y_hwc = jax.block_until_ready(channel_swap(x_chw, "chw_hwc"))
    assert y_hwc.shape == (2, 16, 16, 4)
    assert jnp.array_equal(y_hwc, jnp.transpose(x_chw, (0, 2, 3, 1)))

    # Round trip sanity: chw_hwc(hwc_chw(x)) == x.
    assert jnp.array_equal(channel_swap(y_chw, "chw_hwc"), x_hwc)

    # HW-tiling path with a ragged last HW tile (HW = 2304 is split into 640-row
    # tiles by the min-grid-steps rule -> last tile has 384 rows).
    x_big = jax.random.normal(k3, (1, 48, 48, 3), dtype=jnp.float32)
    y_big = jax.block_until_ready(channel_swap(x_big, "hwc_chw"))
    assert jnp.array_equal(y_big, jnp.transpose(x_big, (0, 3, 1, 2)))
    x_big_c = jax.random.normal(k4, (1, 3, 48, 48), dtype=jnp.float32)
    y_big_c = jax.block_until_ready(channel_swap(x_big_c, "chw_hwc"))
    assert jnp.array_equal(y_big_c, jnp.transpose(x_big_c, (0, 2, 3, 1)))

    # Force a tiny block budget to exercise the 128-row HW tiles directly.
    y_small_blk = jax.block_until_ready(
        channel_swap(x_big, "hwc_chw", max_block_bytes=4096))
    assert jnp.array_equal(y_small_blk, jnp.transpose(x_big, (0, 3, 1, 2)))

    # Batch folding with a ragged last batch tile (n=9, b_tile=2 after the
    # min-grid-steps adjustment; HW=64 < 128 so HW stays a single full tile).
    x_batch = jax.random.normal(k5, (9, 8, 8, 4), dtype=jnp.float32)
    y_batch = jax.block_until_ready(channel_swap(x_batch, "hwc_chw"))
    assert jnp.array_equal(y_batch, jnp.transpose(x_batch, (0, 3, 1, 2)))

    # bf16 path (exercises the dtype-aware sublane-packing accounting).
    x_bf16 = jax.random.normal(k6, (2, 16, 16, 3), dtype=jnp.float32).astype(jnp.bfloat16)
    y_bf16 = jax.block_until_ready(channel_swap(x_bf16, "hwc_chw"))
    assert jnp.array_equal(y_bf16, jnp.transpose(x_bf16, (0, 3, 1, 2)))

    print("KERNEL_OK")
</pallas_src>

<mosaic_0001>
module attributes {stable_mosaic.version = 11 : i64} {
  func.func @_swap_last2_kernel(%arg0: i32, %arg1: i32, %arg2: memref<1x128x4xf32, #tpu.memory_space<vmem>>, %arg3: memref<1x4x128xf32, #tpu.memory_space<vmem>>) attributes {dimension_semantics = [#tpu.dimension_semantics<parallel>, #tpu.dimension_semantics<parallel>], iteration_bounds = array<i64: 2, 2>, scalar_prefetch = 0 : i64, scratch_operands = 0 : i64, tpu.core_type = #tpu.core_type<tc>, window_params = [{transform_indices = @transform_0, window_bounds = array<i64: 1, 128, 4>}, {transform_indices = @transform_1, window_bounds = array<i64: 1, 4, 128>}]} {
    %c0 = arith.constant 0 : index
    %c0_0 = arith.constant 0 : index
    %c0_1 = arith.constant 0 : index
    %0 = vector.load %arg2[%c0, %c0_0, %c0_1] : memref<1x128x4xf32, #tpu.memory_space<vmem>>, vector<1x128x4xf32>
    %1 = tpu.transpose %0, [0, 2, 1] : vector<1x128x4xf32> -> vector<1x4x128xf32>
    %c0_2 = arith.constant 0 : index
    %c0_3 = arith.constant 0 : index
    %c0_4 = arith.constant 0 : index
    %2 = vector.load %arg3[%c0_2, %c0_3, %c0_4] : memref<1x4x128xf32, #tpu.memory_space<vmem>>, vector<1x4x128xf32>
    tpu.vector_store %arg3[%c0_2, %c0_3, %c0_4], %1 {strides = array<i32>} : memref<1x4x128xf32, #tpu.memory_space<vmem>>, vector<1x4x128xf32>,
    return
  }
  func.func @transform_0(%arg0: i32, %arg1: i32) -> (i32, i32, i32) {
    %c0_i32 = arith.constant 0 : i32
    %c0_i32_0 = arith.constant 0 : i32
    return %arg0, %arg1, %c0_i32 : i32, i32, i32
  }
  func.func @transform_1(%arg0: i32, %arg1: i32) -> (i32, i32, i32) {
    %c0_i32 = arith.constant 0 : i32
    %c0_i32_0 = arith.constant 0 : i32
    return %arg0, %c0_i32, %arg1 : i32, i32, i32
  }
}

</mosaic_0001>

<llo_original>
// kernel: channel_swap.1
$region0: #{channel_swap.1}
  #allocation0 [shape = 'u32[]', space=smem, size = 0x4, offset = 0x4, fixed_abs, tag = 'smem constant byte address 0x4 - core index']
  #allocation1 [shape = 'u32[144,128]{1,0:T(1,128)}', space=vmem, size = 0x12000, scoped, tag = 'internal scratch']
  %s0 = inlined_call_operand.vmem [shape: f32[2,256,4], index: 0, kind: input, shape index: {}]
  %s1 = inlined_call_operand.vmem [shape: f32[2,4,256], index: 1, kind: output, shape index: {}]
  %s2 = sld [smem:[#allocation0]]
  $region37: #{channel_swap.1} parent=0
    _
  %s4 = ssub.s32 1, %s2
  %s5 = scalar_select 0, %s4, %s2
  loop: start=0, step=1, limit=6
  $region2: #{channel_swap.1} parent=0 // loop_pre_header
    _
  $region3: #{channel_swap.1} parent=0 // loop_header
    %s7 = sphi 0, %s11
    %p8 = scmp.ge.s32.totalorder %s7, 6
    %s14 = sphi 0, %s26
    %s15 = sphi 0, %s22
    %s16 = sphi 0, %s14
    %s17 = sphi 0, %s15
    %s18 = sphi 0, %s16
    %s19 = sphi 0, %s17
    %s31 = sphi 0, %s33
    %s34 = sphi 0, %s31
    %s35 = sphi 0, %s34
    %s51 = sphi 0, %s35
    %s59 = sphi 0, %s61
    %s62 = sphi 0, %s59
    %s63 = sphi 0, %s62
    %s79 = sphi 0, %s63
  $region4: #{channel_swap.1} parent=0 // loop_header_branch
    %10 = sbr.rel (%p8) target = $region8
  $region5: #{channel_swap.1} parent=0 // loop_body
    %s12 = ssub.s32 %s7, 1
    %s13 = ssub.s32 %s7, 2
    %s20 = sadd.s32 1, %s15
    %p21 = scmp.ge.s32.totalorder %s20, 2
    %s22 = scalar_select %p21, 0, %s20
    %s23 = sadd.s32 1, %s14
    %s24 = scalar_select %p21, %s23, %s14
    %p25 = scmp.ge.s32.totalorder %s24, 2
    %s26 = scalar_select %p25, 0, %s24
    %s27 = ssub.s32 %s14, %s26
    %s28 = ssub.s32 %s15, %s22
    %s29 = sor.u32 %s27, %s28
    %p30 = scmp.eq.s32.totalorder %s29, 0
    %s32 = sadd.s32 %s31, 1
    %s33 = scalar_select %p30, %s31, %s32
    %p36 = pneg %p30
    %p37 = scmp.eq.s32.totalorder %s7, 3
    %p38 = por %p36, %p37
    %p39 = scmp.ne.s32.totalorder %s31, %s34
    %p40 = scmp.eq.s32.totalorder %s7, 0
    %p41 = por %p39, %p40
    %p42 = scmp.ne.s32.totalorder %s31, %s34
    %p43 = scmp.eq.s32.totalorder %s12, 3
    %p44 = por %p42, %p43
    %p45 = scmp.ne.s32.totalorder %s34, %s35
    %p46 = scmp.eq.s32.totalorder %s12, 0
    %p47 = por %p45, %p46
    %p48 = scmp.ne.s32.totalorder %s34, %s35
    %p49 = scmp.eq.s32.totalorder %s13, 3
    %p50 = por %p48, %p49
    %p52 = scmp.ne.s32.totalorder %s35, %s51
    %p53 = scmp.eq.s32.totalorder %s13, 0
    %p54 = por %p52, %p53
    %s55 = ssub.s32 %s14, %s26
    %s56 = ssub.s32 %s15, %s22
    %s57 = sor.u32 %s55, %s56
    %p58 = scmp.eq.s32.totalorder %s57, 0
    %s60 = sadd.s32 %s59, 1
    %s61 = scalar_select %p58, %s59, %s60
    %p64 = pneg %p58
    %p65 = scmp.eq.s32.totalorder %s7, 3
    %p66 = por %p64, %p65
    %p67 = scmp.ne.s32.totalorder %s59, %s62
    %p68 = scmp.eq.s32.totalorder %s7, 0
    %p69 = por %p67, %p68
    %p70 = scmp.ne.s32.totalorder %s59, %s62
    %p71 = scmp.eq.s32.totalorder %s12, 3
    %p72 = por %p70, %p71
    %p73 = scmp.ne.s32.totalorder %s62, %s63
    %p74 = scmp.eq.s32.totalorder %s12, 0
    %p75 = por %p73, %p74
    %p76 = scmp.ne.s32.totalorder %s62, %s63
    %p77 = scmp.eq.s32.totalorder %s13, 3
    %p78 = por %p76, %p77
    %p80 = scmp.ne.s32.totalorder %s63, %s79
    %p81 = scmp.eq.s32.totalorder %s13, 0
    %p82 = por %p80, %p81
    %p83 = scmp.le.s32.totalorder 1, %s7
    %p84 = scmp.lt.s32.totalorder %s7, 5
    %p85 = pnand %p83, %p84
    %p86 = pneg %p85
    // Predicated region
    $region9: #{channel_swap.1} parent=5 // pred_check
      _
    $region10: #{channel_swap.1} parent=5 // pred_check_branch
      %88 = sbr.rel (%p85) target = $region12
    $region11: #{channel_swap.1} parent=5 // pred_region
      %s89 = ssub.s32 %s7, 1
    $region12: #{channel_swap.1} parent=5 // pred_fallthru
      _
    %p90 = scmp.lt.s32.totalorder %s7, 4
    // Predicated region
    $region13: #{channel_swap.1} parent=5 // pred_check
      %p91 = pneg %p90
    $region14: #{channel_swap.1} parent=5 // pred_check_branch
      %93 = sbr.rel (%p91) target = $region16
    $region15: #{channel_swap.1} parent=5 // pred_region
      // Predicated region
      $region17: #{channel_swap.1} parent=15 // pred_check
        %p94 = pneg %p41
      $region18: #{channel_swap.1} parent=15 // pred_check_branch
        %96 = sbr.rel (%p94) target = $region20
      $region19: #{channel_swap.1} parent=15 // pred_region
        %s97 = smul.u32 16, %s15
        %p98 = scmp.lt.s32.totalorder %s14, 1
        %s99 = scalar_select %p98, %s14, 1
        %p100 = scmp.lt.s32.totalorder %s97, 31
        %s101 = scalar_select %p100, %s97, 31
        %s102 = smul.addr %s99, 32
        %s103 = sadd.s32 %s101, %s102
        %s104 = smul.addr %s103, 8
        %s105 = scalar_lea.vmem %s0, %s104
        %s106 = smul.u32 16, %s15
      $region20: #{channel_swap.1} parent=15 // pred_fallthru
        _
    $region16: #{channel_swap.1} parent=5 // pred_fallthru
      _
    %p107 = scmp.le.s32.totalorder 1, %s7
    %p108 = scmp.lt.s32.totalorder %s7, 5
    %p109 = pnand %p107, %p108
    %p110 = pneg %p109
    // Predicated region
    $region21: #{channel_swap.1} parent=5 // pred_check
      _
    $region22: #{channel_swap.1} parent=5 // pred_check_branch
      %112 = sbr.rel (%p109) target = $region24
    $region23: #{channel_swap.1} parent=5 // pred_region
      %s113 = ssub.s32 %s7, 1
      %s114 = smul.u32 16, %s17
      %p115 = scmp.lt.s32.totalorder %s16, 1
      %s116 = scalar_select %p115, %s16, 1
      %p117 = scmp.lt.s32.totalorder %s114, 31
      %s118 = scalar_select %p117, %s114, 31
      %s119 = smul.addr %s116, 32
      %s120 = sadd.s32 %s118, %s119
      %s121 = smul.addr %s120, 8
      %s122 = scalar_lea.vmem %s0, %s121
      %p123 = pneg %p47
      %p124 = pneg %p44
      %p125 = pneg %p75
      %p126 = pneg %p72
      %p127 = scmp.lt.s32.totalorder %s16, 1
      %s128 = scalar_select %p127, %s16, 1
      %p129 = scmp.lt.s32.totalorder %s17, 1
      %s130 = scalar_select %p129, %s17, 1
      %s131 = smul.addr %s128, 2
      %s132 = sadd.s32 %s130, %s131
      %s133 = smul.addr %s132, 4
      %s134 = scalar_lea.vmem %s1, %s133
      %s135 = smul.u32 16, %s17
      %p136 = scmp.lt.s32.totalorder %s16, 1
      %s137 = scalar_select %p136, %s16, 1
      %p138 = scmp.lt.s32.totalorder %s135, 31
      %s139 = scalar_select %p138, %s135, 31
      %s140 = smul.addr %s137, 32
      %s141 = sadd.s32 %s139, %s140
      %s142 = smul.addr %s141, 8
      %s143 = scalar_lea.vmem %s0, %s142
      %s144 = smul.u32 16, %s17
      %p145 = scmp.lt.s32.totalorder %s16, 1
      %s146 = scalar_select %p145, %s16, 1
      %p147 = scmp.lt.s32.totalorder %s17, 1
      %s148 = scalar_select %p147, %s17, 1
      %s149 = smul.addr %s146, 2
      %s150 = sadd.s32 %s148, %s149
      %s151 = smul.addr %s150, 4
      %s152 = scalar_lea.vmem %s1, %s151
      %v153 = vld [vmem:[%s143] sm:$0xff]
      %v154 = vld [vmem:[%s143 + $0x8] sm:$0xff]
      %v155 = vld [vmem:[%s143 + $0x10] sm:$0xff]
      %v156 = vld [vmem:[%s143 + $0x18] sm:$0xff]
      %v157 = vld [vmem:[%s143 + $0x20] sm:$0xff]
      %v158 = vld [vmem:[%s143 + $0x28] sm:$0xff]
      %v159 = vld [vmem:[%s143 + $0x30] sm:$0xff]
      %v160 = vld [vmem:[%s143 + $0x38] sm:$0xff]
      %v161 = vld [vmem:[%s143 + $0x40] sm:$0xff]
      %v162 = vld [vmem:[%s143 + $0x48] sm:$0xff]
      %v163 = vld [vmem:[%s143 + $0x50] sm:$0xff]
      %v164 = vld [vmem:[%s143 + $0x58] sm:$0xff]
      %v165 = vld [vmem:[%s143 + $0x60] sm:$0xff]
      %v166 = vld [vmem:[%s143 + $0x68] sm:$0xff]
      %v167 = vld [vmem:[%s143 + $0x70] sm:$0xff]
      %v168 = vld [vmem:[%s143 + $0x78] sm:$0xff]
      %169 = vxpose.xlu0.b32.start [1/16] %v153, 128
      %170 = vxpose.xlu0.b32.cont [2/16] %v154, 128
      %171 = vxpose.xlu0.b32.cont [3/16] %v155, 128
      %172 = vxpose.xlu0.b32.cont [4/16] %v156, 128
      %173 = vxpose.xlu0.b32.cont [5/16] %v157, 128
      %174 = vxpose.xlu0.b32.cont [6/16] %v158, 128
      %175 = vxpose.xlu0.b32.cont [7/16] %v159, 128
      %176 = vxpose.xlu0.b32.cont [8/16] %v160, 128
      %177 = vxpose.xlu0.b32.cont [9/16] %v161, 128
      %178 = vxpose.xlu0.b32.cont [10/16] %v162, 128
      %179 = vxpose.xlu0.b32.cont [11/16] %v163, 128
      %180 = vxpose.xlu0.b32.cont [12/16] %v164, 128
      %181 = vxpose.xlu0.b32.cont [13/16] %v165, 128
      %182 = vxpose.xlu0.b32.cont [14/16] %v166, 128
      %183 = vxpose.xlu0.b32.cont [15/16] %v167, 128
      %184 = vxpose.xlu0.b32.end [16/16] %v168, 128
      %v185 = vpop.trf.xlu0
      %v186 = vpop.trf.xlu0
      %v187 = vpop.trf.xlu0
      %v188 = vpop.trf.xlu0
      %v189 = vpop.trf.xlu0
      %v190 = vpop.trf.xlu0
      %v191 = vpop.trf.xlu0
      %v192 = vpop.trf.xlu0
      %v193 = vpop.trf.xlu0
      %v194 = vpop.trf.xlu0
      %v195 = vpop.trf.xlu0
      %v196 = vpop.trf.xlu0
      %v197 = vpop.trf.xlu0
      %v198 = vpop.trf.xlu0
      %v199 = vpop.trf.xlu0
      %v200 = vpop.trf.xlu0
      %201 = vst [vmem:[%s152] sm:$0xf] %v185
      %p202 = scmp.lt.s32.totalorder %s16, 1
      %s203 = scalar_select %p202, %s16, 1
      %p204 = scmp.lt.s32.totalorder %s17, 1
      %s205 = scalar_select %p204, %s17, 1
      %s206 = smul.addr %s203, 2
      %s207 = sadd.s32 %s205, %s206
      %s208 = smul.addr %s207, 4
      %s209 = scalar_lea.vmem %s1, %s208
      // Predicated region
      $region25: #{channel_swap.1} parent=23 // pred_check
        %p210 = pneg %p72
      $region26: #{channel_swap.1} parent=23 // pred_check_branch
        %212 = sbr.rel (%p210) target = $region28
      $region27: #{channel_swap.1} parent=23 // pred_region
        _
      $region28: #{channel_swap.1} parent=23 // pred_fallthru
        _
    $region24: #{channel_swap.1} parent=5 // pred_fallthru
      _
    %p213 = scmp.le.s32.totalorder 2, %s7
    // Predicated region
    $region29: #{channel_swap.1} parent=5 // pred_check
      %p214 = pneg %p213
    $region30: #{channel_swap.1} parent=5 // pred_check_branch
      %216 = sbr.rel (%p214) target = $region32
    $region31: #{channel_swap.1} parent=5 // pred_region
      %s217 = ssub.s32 %s7, 2
      // Predicated region
      $region33: #{channel_swap.1} parent=31 // pred_check
        %p218 = pneg %p78
      $region34: #{channel_swap.1} parent=31 // pred_check_branch
        %220 = sbr.rel (%p218) target = $region36
      $region35: #{channel_swap.1} parent=31 // pred_region
        %p221 = scmp.lt.s32.totalorder %s18, 1
        %s222 = scalar_select %p221, %s18, 1
        %p223 = scmp.lt.s32.totalorder %s19, 1
        %s224 = scalar_select %p223, %s19, 1
        %s225 = smul.addr %s222, 2
        %s226 = sadd.s32 %s224, %s225
        %s227 = smul.addr %s226, 4
        %s228 = scalar_lea.vmem %s1, %s227
      $region36: #{channel_swap.1} parent=31 // pred_fallthru
        _
    $region32: #{channel_swap.1} parent=5 // pred_fallthru
      _
  $region6: #{channel_swap.1} parent=0 // loop_footer
    %s11 = sadd.s32 1, %s7
  $region7: #{channel_swap.1} parent=0 // loop_footer_branch
    %6 = sbr.rel target = $region3
  $region8: #{channel_swap.1} parent=0 // loop_exit
    _

</llo_original>
